<compile_context>
chip_gen: v7x
topology: tpu7x:2x2x1
jax: 0.10.0
libtpu: 0.0.40
codegen_flags: <defaults>
</compile_context>

<pallas_src>
import functools

import jax
import jax.numpy as jnp
from jax.experimental import pallas as pl
from jax.experimental.pallas import tpu as pltpu

NUM_INPUTS = 158
NUM_OUTPUTS = 19
HIDDEN_SIZE = 512

H2 = 2 * HIDDEN_SIZE          # fused layer-1 width: [critic | actor] = 1024
OUT_PAD = 128                 # lane-dense packed output: [value | mu(19) | zeros]
MAX_TB = 1024                 # batch-tile cap (well under default scoped VMEM)


def _actor_critic_kernel(x_ref, w1_ref, b1_ref, w2_ref, b2_ref, out_ref):
    # x : (tb, 158) f32        w1: (158, 1024) bf16   b1: (1, 1024) f32
    # w2: (1024, 128) bf16     b2: (1, 128)   f32     out: (tb, 128) bf16
    x = x_ref[...].astype(jnp.bfloat16)            # cast in-kernel, no HBM round trip
    h = jnp.dot(x, w1_ref[...], preferred_element_type=jnp.float32)
    h = jnp.maximum(h + b1_ref[...], 0.0)          # f32 bias + ReLU on the VPU
    y = jnp.dot(h.astype(jnp.bfloat16), w2_ref[...],
                preferred_element_type=jnp.float32) + b2_ref[...]
    out_ref[...] = y.astype(out_ref.dtype)         # lane-dense bf16 store


def prepare_fused_params(params):
    """One-time fusion of actor/critic weights into MXU-friendly bf16 blocks."""
    # Layer 1: (158, 1024) = [W1_critic | W1_actor]; no feature padding needed.
    w1 = jnp.concatenate([params["w1c"], params["w1a"]], axis=1)          # (158, 1024)
    b1 = jnp.concatenate([params["b1c"], params["b1a"]], axis=1)          # (1, 1024)

    # Layer 2: block-diagonal (1024, 128): col 0 = value, cols 1:20 = mu.
    w2 = jnp.zeros((H2, OUT_PAD), jnp.float32)
    w2 = w2.at[:HIDDEN_SIZE, 0:1].set(params["w2c"])
    w2 = w2.at[HIDDEN_SIZE:, 1:1 + NUM_OUTPUTS].set(params["w2a"])
    b2 = jnp.zeros((1, OUT_PAD), jnp.float32)
    b2 = b2.at[:, 0:1].set(params["b2c"])
    b2 = b2.at[:, 1:1 + NUM_OUTPUTS].set(params["b2a"])

    return {
        "w1": w1.astype(jnp.bfloat16),
        "b1": b1.astype(jnp.float32),
        "w2": w2.astype(jnp.bfloat16),
        "b2": b2.astype(jnp.float32),
        "log_std": params["log_std"],
    }


def _bucket_batch(B):
    """Bucket the padded batch size to limit recompiles.

    Returns (B_pad, tb):
      * B <= 1024: next power of two >= 16 (single grid step, 16-aligned for bf16).
      * B  > 1024: multiple of 1024 with tb = 1024 (multi-step 'parallel' grid).
    """
    if B <= MAX_TB:
        B_pad = max(16, 1 << (B - 1).bit_length())
        return B_pad, B_pad
    B_pad = (B + MAX_TB - 1) // MAX_TB * MAX_TB
    return B_pad, MAX_TB


@functools.partial(jax.jit, static_argnames=("tb",))
def _fused_forward(x_pad, w1, b1, w2, b2, *, tb):
    """Fused (value | mu) forward on a batch-padded input.  Returns (B_pad, 128) bf16."""
    B_pad = x_pad.shape[0]
    grid = (B_pad // tb,)

    flops = 2 * B_pad * (NUM_INPUTS * H2 + H2 * OUT_PAD)
    bytes_accessed = (x_pad.size * 4            # f32 input read
                      + w1.size * 2 + b1.size * 4
                      + w2.size * 2 + b2.size * 4
                      + B_pad * OUT_PAD * 2)    # bf16 packed output write

    return pl.pallas_call(
        _actor_critic_kernel,
        out_shape=jax.ShapeDtypeStruct((B_pad, OUT_PAD), jnp.bfloat16),
        grid=grid,
        in_specs=[
            # x: batch-tiled, full-extent 158 lanes (legal: equals the array dim).
            pl.BlockSpec((tb, NUM_INPUTS), lambda i: (i, 0)),
            pl.BlockSpec((NUM_INPUTS, H2), lambda i: (0, 0)),   # W1: resident
            pl.BlockSpec((1, H2), lambda i: (0, 0)),            # b1: resident
            pl.BlockSpec((H2, OUT_PAD), lambda i: (0, 0)),      # W2: resident
            pl.BlockSpec((1, OUT_PAD), lambda i: (0, 0)),       # b2: resident
        ],
        out_specs=pl.BlockSpec((tb, OUT_PAD), lambda i: (i, 0)),
        compiler_params=pltpu.CompilerParams(
            dimension_semantics=("parallel",)),
        cost_estimate=pl.CostEstimate(
            flops=flops, transcendentals=0, bytes_accessed=bytes_accessed),
    )(x_pad, w1, b1, w2, b2)


def actor_critic_forward(x, fused):
    """Fused ActorCritic forward.  Returns (mu, std, value)."""
    B = x.shape[0]
    B_pad, tb = _bucket_batch(B)
    x_pad = x if B_pad == B else jnp.pad(x, ((0, B_pad - B), (0, 0)))

    out = _fused_forward(x_pad, fused["w1"], fused["b1"],
                         fused["w2"], fused["b2"], tb=tb)

    value = out[:B, 0:1].astype(jnp.float32)
    mu = out[:B, 1:1 + NUM_OUTPUTS].astype(jnp.float32)
    # std is independent of x: exp + broadcast live in the wrapper, not the kernel.
    std = jnp.broadcast_to(jnp.exp(fused["log_std"]), mu.shape)
    return mu, std, value


def init_params(key, std_param=0.0):
    """Matches `init_weights`: weight ~ Normal(0, 0.1), bias = 0.1,
    log_std = std_param.  Weights stored as (in_features, out_features)."""
    k1, k2, k3, k4 = jax.random.split(key, 4)

    def w(k, shape):
        return (0.1 * jax.random.normal(k, shape)).astype(jnp.float32)

    return {
        # critic: Linear(158,512) -> ReLU -> Linear(512,1)
        "w1c": w(k1, (NUM_INPUTS, HIDDEN_SIZE)),
        "b1c": jnp.full((1, HIDDEN_SIZE), 0.1, jnp.float32),
        "w2c": w(k2, (HIDDEN_SIZE, 1)),
        "b2c": jnp.full((1, 1), 0.1, jnp.float32),
        # actor: Linear(158,512) -> ReLU -> Linear(512,19)
        "w1a": w(k3, (NUM_INPUTS, HIDDEN_SIZE)),
        "b1a": jnp.full((1, HIDDEN_SIZE), 0.1, jnp.float32),
        "w2a": w(k4, (HIDDEN_SIZE, NUM_OUTPUTS)),
        "b2a": jnp.full((1, NUM_OUTPUTS), 0.1, jnp.float32),
        # log_std = ones(1, num_outputs) * std
        "log_std": jnp.full((1, NUM_OUTPUTS), std_param, jnp.float32),
    }


def _reference_forward_f32(x, p):
    """Pure-JAX f32 reference of the PyTorch forward (unfused)."""
    h_c = jnp.maximum(x @ p["w1c"] + p["b1c"], 0.0)
    value = h_c @ p["w2c"] + p["b2c"]
    h_a = jnp.maximum(x @ p["w1a"] + p["b1a"], 0.0)
    mu = h_a @ p["w2a"] + p["b2a"]
    std = jnp.broadcast_to(jnp.exp(p["log_std"]), mu.shape)
    return mu, std, value


def _reference_forward_bf16(x, fused):
    """Reference mirroring the kernel's bf16 operands / f32 accum / bf16 output."""
    xb = x.astype(jnp.bfloat16).astype(jnp.float32)
    w1 = fused["w1"].astype(jnp.float32)
    w2 = fused["w2"].astype(jnp.float32)
    h = jnp.maximum(xb @ w1 + fused["b1"], 0.0)
    hb = h.astype(jnp.bfloat16).astype(jnp.float32)
    y = (hb @ w2 + fused["b2"]).astype(jnp.bfloat16).astype(jnp.float32)
    return y[:, 1:1 + NUM_OUTPUTS], y[:, 0:1]


if __name__ == "__main__":
    key = jax.random.PRNGKey(0)
    pkey, xkey = jax.random.split(key)

    params = init_params(pkey, std_param=0.0)
    fused = prepare_fused_params(params)

    B = 8
    x = jax.random.normal(xkey, (B, NUM_INPUTS), dtype=jnp.float32)

    mu, std, value = actor_critic_forward(x, fused)
    jax.block_until_ready((mu, std, value))

    mu_ref, std_ref, value_ref = _reference_forward_f32(x, params)
    mu_bf, value_bf = _reference_forward_bf16(x, fused)

    assert mu.shape == (B, NUM_OUTPUTS)
    assert std.shape == (B, NUM_OUTPUTS)
    assert value.shape == (B, 1)
    # bf16 MXU operands + bf16 packed output -> loose tolerance vs f32 reference.
    assert jnp.allclose(mu, mu_ref, atol=1e-1, rtol=5e-2)
    assert jnp.allclose(value, value_ref, atol=1e-1, rtol=5e-2)
    # Tight check vs a reference that applies the same bf16 quantization,
    # which would catch any packing / indexing mistake.
    assert jnp.allclose(mu, mu_bf, atol=5e-2, rtol=2e-2)
    assert jnp.allclose(value, value_bf, atol=5e-2, rtol=2e-2)
    assert jnp.allclose(std, std_ref, atol=1e-5, rtol=1e-5)

    print("KERNEL_OK")
</pallas_src>

<mosaic_0001>
module attributes {stable_mosaic.version = 11 : i64} {
  func.func @_actor_critic_kernel(%arg0: i32, %arg1: memref<16x158xf32, #tpu.memory_space<vmem>>, %arg2: memref<158x1024xbf16, #tpu.memory_space<vmem>>, %arg3: memref<1x1024xf32, #tpu.memory_space<vmem>>, %arg4: memref<1024x128xbf16, #tpu.memory_space<vmem>>, %arg5: memref<1x128xf32, #tpu.memory_space<vmem>>, %arg6: memref<16x128xbf16, #tpu.memory_space<vmem>>) attributes {dimension_semantics = [#tpu.dimension_semantics<parallel>], iteration_bounds = array<i64: 1>, scalar_prefetch = 0 : i64, scratch_operands = 0 : i64, tpu.core_type = #tpu.core_type<tc>, window_params = [{transform_indices = @transform_0, window_bounds = array<i64: 16, 158>}, {pipeline_mode = #tpu.pipeline_mode<synchronous>, transform_indices = @transform_1, window_bounds = array<i64: 158, 1024>}, {pipeline_mode = #tpu.pipeline_mode<synchronous>, transform_indices = @transform_2, window_bounds = array<i64: 1, 1024>}, {pipeline_mode = #tpu.pipeline_mode<synchronous>, transform_indices = @transform_3, window_bounds = array<i64: 1024, 128>}, {pipeline_mode = #tpu.pipeline_mode<synchronous>, transform_indices = @transform_4, window_bounds = array<i64: 1, 128>}, {transform_indices = @transform_5, window_bounds = array<i64: 16, 128>}]} {
    %c0 = arith.constant 0 : index
    %c0_0 = arith.constant 0 : index
    %0 = vector.load %arg1[%c0, %c0_0] : memref<16x158xf32, #tpu.memory_space<vmem>>, vector<16x158xf32>
    %1 = arith.truncf %0 : vector<16x158xf32> to vector<16x158xbf16>
    %c0_1 = arith.constant 0 : index
    %c0_2 = arith.constant 0 : index
    %2 = vector.load %arg2[%c0_1, %c0_2] : memref<158x1024xbf16, #tpu.memory_space<vmem>>, vector<158x1024xbf16>
    %cst = arith.constant dense<0.000000e+00> : vector<16x1024xf32>
    %3 = tpu.matmul %1, %2, %cst {dimension_numbers = #tpu.dot_dimension_numbers<[1], [0], [0], [1], [0, 0, 1, 1], [], []>} : vector<16x158xbf16>, vector<158x1024xbf16>, vector<16x1024xf32> -> vector<16x1024xf32>
    %c0_3 = arith.constant 0 : index
    %c0_4 = arith.constant 0 : index
    %4 = vector.load %arg3[%c0_3, %c0_4] : memref<1x1024xf32, #tpu.memory_space<vmem>>, vector<1x1024xf32>
    %5 = vector.broadcast %4 : vector<1x1024xf32> to vector<16x1024xf32>
    %6 = arith.addf %3, %5 : vector<16x1024xf32>
    %cst_5 = arith.constant 0.000000e+00 : f32
    %7 = vector.broadcast %cst_5 : f32 to vector<16x1024xf32>
    %8 = arith.maximumf %6, %7 : vector<16x1024xf32>
    %9 = arith.truncf %8 : vector<16x1024xf32> to vector<16x1024xbf16>
    %c0_6 = arith.constant 0 : index
    %c0_7 = arith.constant 0 : index
    %10 = vector.load %arg4[%c0_6, %c0_7] : memref<1024x128xbf16, #tpu.memory_space<vmem>>, vector<1024x128xbf16>
    %cst_8 = arith.constant dense<0.000000e+00> : vector<16x128xf32>
    %11 = tpu.matmul %9, %10, %cst_8 {dimension_numbers = #tpu.dot_dimension_numbers<[1], [0], [0], [1], [0, 0, 1, 1], [], []>} : vector<16x1024xbf16>, vector<1024x128xbf16>, vector<16x128xf32> -> vector<16x128xf32>
    %c0_9 = arith.constant 0 : index
    %c0_10 = arith.constant 0 : index
    %12 = vector.load %arg5[%c0_9, %c0_10] : memref<1x128xf32, #tpu.memory_space<vmem>>, vector<1x128xf32>
    %13 = vector.broadcast %12 : vector<1x128xf32> to vector<16x128xf32>
    %14 = arith.addf %11, %13 : vector<16x128xf32>
    %15 = arith.truncf %14 : vector<16x128xf32> to vector<16x128xbf16>
    %c0_11 = arith.constant 0 : index
    %c0_12 = arith.constant 0 : index
    %16 = vector.load %arg6[%c0_11, %c0_12] : memref<16x128xbf16, #tpu.memory_space<vmem>>, vector<16x128xbf16>
    tpu.vector_store %arg6[%c0_11, %c0_12], %15 {strides = array<i32>} : memref<16x128xbf16, #tpu.memory_space<vmem>>, vector<16x128xbf16>,
    return
  }
  func.func @transform_0(%arg0: i32) -> (i32, i32) {
    %c0_i32 = arith.constant 0 : i32
    %c0_i32_0 = arith.constant 0 : i32
    return %arg0, %c0_i32 : i32, i32
  }
  func.func @transform_1(%arg0: i32) -> (i32, i32) {
    %c0_i32 = arith.constant 0 : i32
    %c0_i32_0 = arith.constant 0 : i32
    %c0_i32_1 = arith.constant 0 : i32
    return %c0_i32, %c0_i32_0 : i32, i32
  }
  func.func @transform_2(%arg0: i32) -> (i32, i32) {
    %c0_i32 = arith.constant 0 : i32
    %c0_i32_0 = arith.constant 0 : i32
    %c0_i32_1 = arith.constant 0 : i32
    return %c0_i32, %c0_i32_0 : i32, i32
  }
  func.func @transform_3(%arg0: i32) -> (i32, i32) {
    %c0_i32 = arith.constant 0 : i32
    %c0_i32_0 = arith.constant 0 : i32
    %c0_i32_1 = arith.constant 0 : i32
    return %c0_i32, %c0_i32_0 : i32, i32
  }
  func.func @transform_4(%arg0: i32) -> (i32, i32) {
    %c0_i32 = arith.constant 0 : i32
    %c0_i32_0 = arith.constant 0 : i32
    %c0_i32_1 = arith.constant 0 : i32
    return %c0_i32, %c0_i32_0 : i32, i32
  }
  func.func @transform_5(%arg0: i32) -> (i32, i32) {
    %c0_i32 = arith.constant 0 : i32
    %c0_i32_0 = arith.constant 0 : i32
    return %arg0, %c0_i32 : i32, i32
  }
}

</mosaic_0001>

<llo_original>
// kernel: _fused_forward.1
$region0: #{_fused_forward.1}
  #allocation0 [shape = 'u32[]', space=smem, size = 0x4, offset = 0x4, fixed_abs, tag = 'smem constant byte address 0x4 - core index']
  #allocation1 [shape = 'u32[144,128]{1,0:T(1,128)}', space=vmem, size = 0x12000, scoped, tag = 'internal scratch']
  %s0 = inlined_call_operand.hbm [shape: f32[16,158], index: 0, kind: input, shape index: {}]
  %s1 = inlined_call_operand.hbm [shape: bf16[158,1024], index: 1, kind: input, shape index: {}]
  %s2 = inlined_call_operand.hbm [shape: f32[1,1024], index: 2, kind: input, shape index: {}]
  %s3 = inlined_call_operand.hbm [shape: bf16[1024,128], index: 3, kind: input, shape index: {}]
  %s4 = inlined_call_operand.vmem [shape: f32[1,128], index: 4, kind: input, shape index: {}]
  %s5 = inlined_call_operand.hbm [shape: bf16[16,128], index: 5, kind: output, shape index: {}]
  %s6 = sld [smem:[#allocation0]]
  $region46: #{_fused_forward.1} parent=0
    _
  %s8 = ssub.s32 1, %s6
  %s9 = scalar_select 0, %s8, %s6
  $region1: #{_fused_forward.1} parent=0
    #allocation2 [shape = 'u8[16384]{0}', space=vmem, size = 0x4000, scoped, tag = 'input window, operand 0, single buffered']
    #allocation3 [shape = 's32[1]{0}', space=sflag, size = 0x4, scoped, tag = 'scoped memory for _fused_forward.1']
    #allocation4 [shape = 's32[1]{0}', space=sflag, size = 0x4, scoped, tag = 'scoped memory for _fused_forward.1']
    #allocation5 [shape = 'u8[327680]{0}', space=vmem, size = 0x50000, scoped, tag = 'input window, operand 1, single buffered']
    #allocation6 [shape = 's32[1]{0}', space=sflag, size = 0x4, scoped, tag = 'scoped memory for _fused_forward.1']
    #allocation7 [shape = 'u8[4096]{0}', space=vmem, size = 0x1000, scoped, tag = 'input window, operand 2, single buffered']
    #allocation8 [shape = 'u8[262144]{0}', space=vmem, size = 0x40000, scoped, tag = 'input window, operand 3, single buffered']
    #allocation9 [shape = 's32[1]{0}', space=sflag, size = 0x4, scoped, tag = 'scoped memory for _fused_forward.1']
    #allocation10 [shape = 'u8[4096]{0}', space=vmem, size = 0x1000, scoped, tag = 'output window, operand 0, single buffered']
    %10 = vsyncpa [#allocation3], 0
    %11 = vsyncpa [#allocation6], 0
    %12 = vsyncpa [#allocation9], 0
    %13 = vsyncpa [#allocation4], 0
    // Predicated region
    $region2: #{_fused_forward.1} parent=1 // pred_check
      _
    $region3: #{_fused_forward.1} parent=1 // pred_check_branch
      %15 = sbr.rel (0) target = $region5
    $region4: #{_fused_forward.1} parent=1 // pred_region
      %s17 = ssub.s32 512, 512
      %18 = vsyncadd [#allocation3], %s17
      %s19 = sshll.u32 [#allocation2], 4
      %s20 = int_to_ptr.vmem [resolvable:$true] %s19
      %25 = dma.hbm_to_vmem [thread:$0]  %s0, 512, %s20, [#allocation3], 256, 256, 16
    $region5: #{_fused_forward.1} parent=1 // pred_fallthru
      _
    // Predicated region
    $region6: #{_fused_forward.1} parent=1 // pred_check
      _
    $region7: #{_fused_forward.1} parent=1 // pred_check_branch
      %27 = sbr.rel (0) target = $region9
    $region8: #{_fused_forward.1} parent=1 // pred_region
      %s29 = ssub.s32 10240, 10240
      %30 = vsyncadd [#allocation6], %s29
      %s31 = sshll.u32 [#allocation5], 4
      %s32 = int_to_ptr.vmem [resolvable:$true] %s31
      %37 = dma.hbm_to_vmem [thread:$0]  %s1, 10240, %s32, [#allocation6], 512, 512, 32
    $region9: #{_fused_forward.1} parent=1 // pred_fallthru
      _
    // Predicated region
    $region10: #{_fused_forward.1} parent=1 // pred_check
      _
    $region11: #{_fused_forward.1} parent=1 // pred_check_branch
      %39 = sbr.rel (0) target = $region13
    $region12: #{_fused_forward.1} parent=1 // pred_region
      %s41 = ssub.s32 128, 128
      %42 = vsyncadd [#allocation6], %s41
      %s44 = sshll.u32 [#allocation7], 4
      %s45 = int_to_ptr.vmem [resolvable:$true] %s44
      %47 = dma.hbm_to_vmem [thread:$0]  %s2, 128, %s45, [#allocation6]
    $region13: #{_fused_forward.1} parent=1 // pred_fallthru
      _
    // Predicated region
    $region14: #{_fused_forward.1} parent=1 // pred_check
      _
    $region15: #{_fused_forward.1} parent=1 // pred_check_branch
      %49 = sbr.rel (0) target = $region17
    $region16: #{_fused_forward.1} parent=1 // pred_region
      %s51 = ssub.s32 8192, 8192
      %52 = vsyncadd [#allocation9], %s51
      %s53 = sshll.u32 [#allocation8], 4
      %s54 = int_to_ptr.vmem [resolvable:$true] %s53
      %59 = dma.hbm_to_vmem [thread:$0]  %s3, 8192, %s54, [#allocation9], 64, 64, 4
    $region17: #{_fused_forward.1} parent=1 // pred_fallthru
      _
    // Predicated region
    $region18: #{_fused_forward.1} parent=1 // pred_check
      _
    $region19: #{_fused_forward.1} parent=1 // pred_check_branch
      %61 = sbr.rel (0) target = $region21
    $region20: #{_fused_forward.1} parent=1 // pred_region
      _
    $region21: #{_fused_forward.1} parent=1 // pred_fallthru
      _
    // Predicated region
    $region22: #{_fused_forward.1} parent=1 // pred_check
      _
    $region23: #{_fused_forward.1} parent=1 // pred_check_branch
      %63 = sbr.rel (0) target = $region25
    $region24: #{_fused_forward.1} parent=1 // pred_region
      %64 = dma.done [#allocation3], 512
    $region25: #{_fused_forward.1} parent=1 // pred_fallthru
      _
    // Predicated region
    $region26: #{_fused_forward.1} parent=1 // pred_check
      _
    $region27: #{_fused_forward.1} parent=1 // pred_check_branch
      %66 = sbr.rel (0) target = $region29
    $region28: #{_fused_forward.1} parent=1 // pred_region
      %67 = dma.done [#allocation6], 10240
    $region29: #{_fused_forward.1} parent=1 // pred_fallthru
      _
    // Predicated region
    $region30: #{_fused_forward.1} parent=1 // pred_check
      _
    $region31: #{_fused_forward.1} parent=1 // pred_check_branch
      %69 = sbr.rel (0) target = $region33
    $region32: #{_fused_forward.1} parent=1 // pred_region
      %70 = dma.done [#allocation6], 128
    $region33: #{_fused_forward.1} parent=1 // pred_fallthru
      _
    // Predicated region
    $region34: #{_fused_forward.1} parent=1 // pred_check
      _
    $region35: #{_fused_forward.1} parent=1 // pred_check_branch
      %72 = sbr.rel (0) target = $region37
    $region36: #{_fused_forward.1} parent=1 // pred_region
      %73 = dma.done [#allocation9], 8192
    $region37: #{_fused_forward.1} parent=1 // pred_fallthru
      _
    %v75 = vld [vmem:[#allocation2] sm:$0xff]
    %v76 = vld [vmem:[#allocation2 + $0x8] sm:$0xff]
    %v77 = vld [vmem:[#allocation2 + $0x10] sm:$0xff]
    %v78 = vld [vmem:[#allocation2 + $0x18] sm:$0xff]
    %v79 = vpack.c.bf16 %v77, %v75
    %v80 = vpack.c.bf16 %v78, %v76
    %v81 = vld [vmem:[#allocation5] sm:$0xff]
    %v82 = vld [vmem:[#allocation5 + $0x8] sm:$0xff]
    %v83 = vld [vmem:[#allocation5 + $0x10] sm:$0xff]
    %v84 = vld [vmem:[#allocation5 + $0x18] sm:$0xff]
    %v85 = vld [vmem:[#allocation5 + $0x20] sm:$0xff]
    %v86 = vld [vmem:[#allocation5 + $0x28] sm:$0xff]
    %v87 = vld [vmem:[#allocation5 + $0x30] sm:$0xff]
    %v88 = vld [vmem:[#allocation5 + $0x38] sm:$0xff]
    %v89 = vld [vmem:[#allocation5 + $0x40] sm:$0xff]
    %v90 = vld [vmem:[#allocation5 + $0x48] sm:$0xff]
    %v91 = vld [vmem:[#allocation5 + $0x50] sm:$0xff]
    %v92 = vld [vmem:[#allocation5 + $0x58] sm:$0xff]
    %v93 = vld [vmem:[#allocation5 + $0x60] sm:$0xff]
    %v94 = vld [vmem:[#allocation5 + $0x68] sm:$0xff]
    %v95 = vld [vmem:[#allocation5 + $0x70] sm:$0xff]
    %v96 = vld [vmem:[#allocation5 + $0x78] sm:$0xff]
    %v97 = vld [vmem:[#allocation5 + $0x80] sm:$0xff]
    %v98 = vld [vmem:[#allocation5 + $0x88] sm:$0xff]
    %v99 = vld [vmem:[#allocation5 + $0x90] sm:$0xff]
    %v100 = vld [vmem:[#allocation5 + $0x98] sm:$0xff]
    %v101 = vld [vmem:[#allocation5 + $0xa0] sm:$0xff]
    %v102 = vld [vmem:[#allocation5 + $0xa8] sm:$0xff]
    %v103 = vld [vmem:[#allocation5 + $0xb0] sm:$0xff]
    %v104 = vld [vmem:[#allocation5 + $0xb8] sm:$0xff]
    %v105 = vld [vmem:[#allocation5 + $0xc0] sm:$0xff]
    %v106 = vld [vmem:[#allocation5 + $0xc8] sm:$0xff]
    %v107 = vld [vmem:[#allocation5 + $0xd0] sm:$0xff]
    %v108 = vld [vmem:[#allocation5 + $0xd8] sm:$0xff]
    %v109 = vld [vmem:[#allocation5 + $0xe0] sm:$0xff]
    %v110 = vld [vmem:[#allocation5 + $0xe8] sm:$0xff]
    %v111 = vld [vmem:[#allocation5 + $0xf0] sm:$0xff]
    %v112 = vld [vmem:[#allocation5 + $0xf8] sm:$0xff]
    %v113 = vld [vmem:[#allocation5 + $0x100] sm:$0xff]
    %v114 = vld [vmem:[#allocation5 + $0x108] sm:$0xff]
    %v115 = vld [vmem:[#allocation5 + $0x110] sm:$0xff]
    %v116 = vld [vmem:[#allocation5 + $0x118] sm:$0xff]
    %v117 = vld [vmem:[#allocation5 + $0x120] sm:$0xff]
    %v118 = vld [vmem:[#allocation5 + $0x128] sm:$0xff]
    %v119 = vld [vmem:[#allocation5 + $0x130] sm:$0xff]
    %v120 = vld [vmem:[#allocation5 + $0x138] sm:$0xff]
    %v121 = vld [vmem:[#allocation5 + $0x140] sm:$0xff]
    %v122 = vld [vmem:[#allocation5 + $0x148] sm:$0xff]
    %v123 = vld [vmem:[#allocation5 + $0x150] sm:$0xff]
    %v124 = vld [vmem:[#allocation5 + $0x158] sm:$0xff]
    %v125 = vld [vmem:[#allocation5 + $0x160] sm:$0xff]
    %v126 = vld [vmem:[#allocation5 + $0x168] sm:$0xff]
    %v127 = vld [vmem:[#allocation5 + $0x170] sm:$0xff]
    %v128 = vld [vmem:[#allocation5 + $0x178] sm:$0xff]
    %v129 = vld [vmem:[#allocation5 + $0x180] sm:$0xff]
    %v130 = vld [vmem:[#allocation5 + $0x188] sm:$0xff]
    %v131 = vld [vmem:[#allocation5 + $0x190] sm:$0xff]
    %v132 = vld [vmem:[#allocation5 + $0x198] sm:$0xff]
    %v133 = vld [vmem:[#allocation5 + $0x1a0] sm:$0xff]
    %v134 = vld [vmem:[#allocation5 + $0x1a8] sm:$0xff]
    %v135 = vld [vmem:[#allocation5 + $0x1b0] sm:$0xff]
    %v136 = vld [vmem:[#allocation5 + $0x1b8] sm:$0xff]
    %v137 = vld [vmem:[#allocation5 + $0x1c0] sm:$0xff]
    %v138 = vld [vmem:[#allocation5 + $0x1c8] sm:$0xff]
    %v139 = vld [vmem:[#allocation5 + $0x1d0] sm:$0xff]
    %v140 = vld [vmem:[#allocation5 + $0x1d8] sm:$0xff]
    %v141 = vld [vmem:[#allocation5 + $0x1e0] sm:$0xff]
    %v142 = vld [vmem:[#allocation5 + $0x1e8] sm:$0xff]
    %v143 = vld [vmem:[#allocation5 + $0x1f0] sm:$0xff]
    %v144 = vld [vmem:[#allocation5 + $0x1f8] sm:$0xff]
    %v145 = vld [vmem:[#allocation5 + $0x200] sm:$0xff]
    %v146 = vld [vmem:[#allocation5 + $0x208] sm:$0xff]
    %v147 = vld [vmem:[#allocation5 + $0x210] sm:$0xff]
    %v148 = vld [vmem:[#allocation5 + $0x218] sm:$0xff]
    %v149 = vld [vmem:[#allocation5 + $0x220] sm:$0xff]
    %v150 = vld [vmem:[#allocation5 + $0x228] sm:$0xff]
    %v151 = vld [vmem:[#allocation5 + $0x230] sm:$0xff]
    %v152 = vld [vmem:[#allocation5 + $0x238] sm:$0xff]
    %v153 = vld [vmem:[#allocation5 + $0x240] sm:$0xff]
    %v154 = vld [vmem:[#allocation5 + $0x248] sm:$0xff]
    %v155 = vld [vmem:[#allocation5 + $0x250] sm:$0xff]
    %v156 = vld [vmem:[#allocation5 + $0x258] sm:$0xff]
    %v157 = vld [vmem:[#allocation5 + $0x260] sm:$0x77]
    %v158 = vld [vmem:[#allocation5 + $0x268] sm:$0x77]
    %v159 = vld [vmem:[#allocation5 + $0x270] sm:$0x77]
    %v160 = vld [vmem:[#allocation5 + $0x278] sm:$0x77]
    %v161 = vld [vmem:[#allocation7] sm:$0xff]
    %v163 = vlaneseq
    %v164 = vshrl.u32 %v163, 7
    %v165 = vsub.s32 0, %v164
    %v166 = vrot.slane %v161, %v165
    %v167 = vlaneseq
    %v168 = vshrl.u32 %v167, 7
    %v169 = vsub.s32 1, %v168
    %v170 = vrot.slane %v161, %v169
    %v171 = vlaneseq
    %v172 = vshrl.u32 %v171, 7
    %v173 = vsub.s32 2, %v172
    %v174 = vrot.slane %v161, %v173
    %v175 = vlaneseq
    %v176 = vshrl.u32 %v175, 7
    %v177 = vsub.s32 3, %v176
    %v178 = vrot.slane %v161, %v177
    %v179 = vlaneseq
    %v180 = vshrl.u32 %v179, 7
    %v181 = vsub.s32 4, %v180
    %v182 = vrot.slane %v161, %v181
    %v183 = vlaneseq
    %v184 = vshrl.u32 %v183, 7
    %v185 = vsub.s32 5, %v184
    %v186 = vrot.slane %v161, %v185
    %v187 = vlaneseq
    %v188 = vshrl.u32 %v187, 7
    %v189 = vsub.s32 6, %v188
    %v190 = vrot.slane %v161, %v189
    %v191 = vlaneseq
    %v192 = vshrl.u32 %v191, 7
    %v193 = vsub.s32 7, %v192
    %v194 = vrot.slane %v161, %v193
    %v283 = vunpack.c.l.b16 %v81
    %v284 = vunpack.c.h.b16 %v81
    %v285 = vunpack.c.l.b16 %v82
    %v286 = vunpack.c.h.b16 %v82
    %v287 = vunpack.c.l.b16 %v83
    %v288 = vunpack.c.h.b16 %v83
    %v289 = vunpack.c.l.b16 %v84
    %v290 = vunpack.c.h.b16 %v84
    %v291 = vunpack.c.l.b16 %v85
    %v292 = vunpack.c.h.b16 %v85
    %v293 = vunpack.c.l.b16 %v86
    %v294 = vunpack.c.h.b16 %v86
    %v295 = vunpack.c.l.b16 %v87
    %v296 = vunpack.c.h.b16 %v87
    %v297 = vunpack.c.l.b16 %v88
    %v298 = vunpack.c.h.b16 %v88
    %v299 = vunpack.c.l.b16 %v89
    %v300 = vunpack.c.h.b16 %v89
    %v301 = vunpack.c.l.b16 %v90
    %v302 = vunpack.c.h.b16 %v90
    %v303 = vunpack.c.l.b16 %v91
    %v304 = vunpack.c.h.b16 %v91
    %v305 = vunpack.c.l.b16 %v92
    %v306 = vunpack.c.h.b16 %v92
    %v307 = vunpack.c.l.b16 %v93
    %v308 = vunpack.c.h.b16 %v93
    %v309 = vunpack.c.l.b16 %v94
    %v310 = vunpack.c.h.b16 %v94
    %v311 = vunpack.c.l.b16 %v95
    %v312 = vunpack.c.h.b16 %v95
    %v313 = vunpack.c.l.b16 %v96
    %v314 = vunpack.c.h.b16 %v96
    %v315 = vunpack.c.l.b16 %v97
    %v316 = vunpack.c.h.b16 %v97
    %v317 = vunpack.c.l.b16 %v98
    %v318 = vunpack.c.h.b16 %v98
    %v319 = vunpack.c.l.b16 %v99
    %v320 = vunpack.c.h.b16 %v99
    %v321 = vunpack.c.l.b16 %v100
    %v322 = vunpack.c.h.b16 %v100
    %v323 = vunpack.c.l.b16 %v101
    %v324 = vunpack.c.h.b16 %v101
    %v325 = vunpack.c.l.b16 %v102
    %v326 = vunpack.c.h.b16 %v102
    %v327 = vunpack.c.l.b16 %v103
    %v328 = vunpack.c.h.b16 %v103
    %v329 = vunpack.c.l.b16 %v104
    %v330 = vunpack.c.h.b16 %v104
    %v331 = vunpack.c.l.b16 %v105
    %v332 = vunpack.c.h.b16 %v105
    %v333 = vunpack.c.l.b16 %v106
    %v334 = vunpack.c.h.b16 %v106
    %v335 = vunpack.c.l.b16 %v107
    %v336 = vunpack.c.h.b16 %v107
    %v337 = vunpack.c.l.b16 %v108
    %v338 = vunpack.c.h.b16 %v108
    %v339 = vunpack.c.l.b16 %v109
    %v340 = vunpack.c.h.b16 %v109
    %v341 = vunpack.c.l.b16 %v110
    %v342 = vunpack.c.h.b16 %v110
    %v343 = vunpack.c.l.b16 %v111
    %v344 = vunpack.c.h.b16 %v111
    %v345 = vunpack.c.l.b16 %v112
    %v346 = vunpack.c.h.b16 %v112
    %v347 = vunpack.c.l.b16 %v113
    %v348 = vunpack.c.h.b16 %v113
    %v349 = vunpack.c.l.b16 %v114
    %v350 = vunpack.c.h.b16 %v114
    %v351 = vunpack.c.l.b16 %v115
    %v352 = vunpack.c.h.b16 %v115
    %v353 = vunpack.c.l.b16 %v116
    %v354 = vunpack.c.h.b16 %v116
    %v355 = vunpack.c.l.b16 %v117
    %v356 = vunpack.c.h.b16 %v117
    %v357 = vunpack.c.l.b16 %v118
    %v358 = vunpack.c.h.b16 %v118
    %v359 = vunpack.c.l.b16 %v119
    %v360 = vunpack.c.h.b16 %v119
    %v361 = vunpack.c.l.b16 %v120
    %v362 = vunpack.c.h.b16 %v120
    %v363 = vunpack.c.l.b16 %v121
    %v364 = vunpack.c.h.b16 %v121
    %v365 = vunpack.c.l.b16 %v122
    %v366 = vunpack.c.h.b16 %v122
    %v367 = vunpack.c.l.b16 %v123
    %v368 = vunpack.c.h.b16 %v123
    %v369 = vunpack.c.l.b16 %v124
    %v370 = vunpack.c.h.b16 %v124
    %v371 = vunpack.c.l.b16 %v125
    %v372 = vunpack.c.h.b16 %v125
    %v373 = vunpack.c.l.b16 %v126
    %v374 = vunpack.c.h.b16 %v126
    %v375 = vunpack.c.l.b16 %v127
    %v376 = vunpack.c.h.b16 %v127
    %v377 = vunpack.c.l.b16 %v128
    %v378 = vunpack.c.h.b16 %v128
    %v379 = vunpack.c.l.b16 %v129
    %v380 = vunpack.c.h.b16 %v129
    %v381 = vunpack.c.l.b16 %v130
    %v382 = vunpack.c.h.b16 %v130
    %v383 = vunpack.c.l.b16 %v131
    %v384 = vunpack.c.h.b16 %v131
    %v385 = vunpack.c.l.b16 %v132
    %v386 = vunpack.c.h.b16 %v132
    %v387 = vunpack.c.l.b16 %v133
    %v388 = vunpack.c.h.b16 %v133
    %v389 = vunpack.c.l.b16 %v134
    %v390 = vunpack.c.h.b16 %v134
    %v391 = vunpack.c.l.b16 %v135
    %v392 = vunpack.c.h.b16 %v135
    %v393 = vunpack.c.l.b16 %v136
    %v394 = vunpack.c.h.b16 %v136
    %v395 = vunpack.c.l.b16 %v137
    %v396 = vunpack.c.h.b16 %v137
    %v397 = vunpack.c.l.b16 %v138
    %v398 = vunpack.c.h.b16 %v138
    %v399 = vunpack.c.l.b16 %v139
    %v400 = vunpack.c.h.b16 %v139
    %v401 = vunpack.c.l.b16 %v140
    %v402 = vunpack.c.h.b16 %v140
    %v403 = vunpack.c.l.b16 %v141
    %v404 = vunpack.c.h.b16 %v141
    %v405 = vunpack.c.l.b16 %v142
    %v406 = vunpack.c.h.b16 %v142
    %v407 = vunpack.c.l.b16 %v143
    %v408 = vunpack.c.h.b16 %v143
    %v409 = vunpack.c.l.b16 %v144
    %v410 = vunpack.c.h.b16 %v144
    %v411 = vunpack.c.l.b16 %v145
    %v412 = vunpack.c.h.b16 %v145
    %v413 = vunpack.c.l.b16 %v146
    %v414 = vunpack.c.h.b16 %v146
    %v415 = vunpack.c.l.b16 %v147
    %v416 = vunpack.c.h.b16 %v147
    %v417 = vunpack.c.l.b16 %v148
    %v418 = vunpack.c.h.b16 %v148
    %v419 = vunpack.c.l.b16 %v149
    %v420 = vunpack.c.h.b16 %v149
    %v421 = vunpack.c.l.b16 %v150
    %v422 = vunpack.c.h.b16 %v150
    %v423 = vunpack.c.l.b16 %v151
    %v424 = vunpack.c.h.b16 %v151
    %v425 = vunpack.c.l.b16 %v152
    %v426 = vunpack.c.h.b16 %v152
    %v427 = vunpack.c.l.b16 %v153
    %v428 = vunpack.c.h.b16 %v153
    %v429 = vunpack.c.l.b16 %v154
    %v430 = vunpack.c.h.b16 %v154
    %v431 = vunpack.c.l.b16 %v155
    %v432 = vunpack.c.h.b16 %v155
    %v433 = vunpack.c.l.b16 %v156
    %v434 = vunpack.c.h.b16 %v156
    %v435 = vunpack.c.l.b16 %v157
    %v436 = vunpack.c.h.b16 %v157
    %v437 = vunpack.c.l.b16 %v158
    %v438 = vunpack.c.h.b16 %v158
    %v439 = vunpack.c.l.b16 %v159
    %v440 = vunpack.c.h.b16 %v159
    %v441 = vunpack.c.l.b16 %v160
    %v442 = vunpack.c.h.b16 %v160
    %v443 = vpack.c.b16 %v291, %v283
    %v444 = vpack.c.b16 %v292, %v284
    %v445 = vpack.c.b16 %v293, %v285
    %v446 = vpack.c.b16 %v294, %v286
    %v447 = vpack.c.b16 %v295, %v287
    %v448 = vpack.c.b16 %v296, %v288
    %v449 = vpack.c.b16 %v297, %v289
    %v450 = vpack.c.b16 %v298, %v290
    %v451 = vpack.c.b16 %v307, %v299
    %v452 = vpack.c.b16 %v308, %v300
    %v453 = vpack.c.b16 %v309, %v301
    %v454 = vpack.c.b16 %v310, %v302
    %v455 = vpack.c.b16 %v311, %v303
    %v456 = vpack.c.b16 %v312, %v304
    %v457 = vpack.c.b16 %v313, %v305
    %v458 = vpack.c.b16 %v314, %v306
    %v459 = vpack.c.b16 %v323, %v315
    %v460 = vpack.c.b16 %v324, %v316
    %v461 = vpack.c.b16 %v325, %v317
    %v462 = vpack.c.b16 %v326, %v318
    %v463 = vpack.c.b16 %v327, %v319
    %v464 = vpack.c.b16 %v328, %v320
    %v465 = vpack.c.b16 %v329, %v321
    %v466 = vpack.c.b16 %v330, %v322
    %v467 = vpack.c.b16 %v339, %v331
    %v468 = vpack.c.b16 %v340, %v332
    %v469 = vpack.c.b16 %v341, %v333
    %v470 = vpack.c.b16 %v342, %v334
    %v471 = vpack.c.b16 %v343, %v335
    %v472 = vpack.c.b16 %v344, %v336
    %v473 = vpack.c.b16 %v345, %v337
    %v474 = vpack.c.b16 %v346, %v338
    %v475 = vpack.c.b16 %v355, %v347
    %v476 = vpack.c.b16 %v356, %v348
    %v477 = vpack.c.b16 %v357, %v349
    %v478 = vpack.c.b16 %v358, %v350
    %v479 = vpack.c.b16 %v359, %v351
    %v480 = vpack.c.b16 %v360, %v352
    %v481 = vpack.c.b16 %v361, %v353
    %v482 = vpack.c.b16 %v362, %v354
    %v483 = vpack.c.b16 %v371, %v363
    %v484 = vpack.c.b16 %v372, %v364
    %v485 = vpack.c.b16 %v373, %v365
    %v486 = vpack.c.b16 %v374, %v366
    %v487 = vpack.c.b16 %v375, %v367
    %v488 = vpack.c.b16 %v376, %v368
    %v489 = vpack.c.b16 %v377, %v369
    %v490 = vpack.c.b16 %v378, %v370
    %v491 = vpack.c.b16 %v387, %v379
    %v492 = vpack.c.b16 %v388, %v380
    %v493 = vpack.c.b16 %v389, %v381
    %v494 = vpack.c.b16 %v390, %v382
    %v495 = vpack.c.b16 %v391, %v383
    %v496 = vpack.c.b16 %v392, %v384
    %v497 = vpack.c.b16 %v393, %v385
    %v498 = vpack.c.b16 %v394, %v386
    %v499 = vpack.c.b16 %v403, %v395
    %v500 = vpack.c.b16 %v404, %v396
    %v501 = vpack.c.b16 %v405, %v397
    %v502 = vpack.c.b16 %v406, %v398
    %v503 = vpack.c.b16 %v407, %v399
    %v504 = vpack.c.b16 %v408, %v400
    %v505 = vpack.c.b16 %v409, %v401
    %v506 = vpack.c.b16 %v410, %v402
    %v507 = vpack.c.b16 %v419, %v411
    %v508 = vpack.c.b16 %v420, %v412
    %v509 = vpack.c.b16 %v421, %v413
    %v510 = vpack.c.b16 %v422, %v414
    %v511 = vpack.c.b16 %v423, %v415
    %v512 = vpack.c.b16 %v424, %v416
    %v513 = vpack.c.b16 %v425, %v417
    %v514 = vpack.c.b16 %v426, %v418
    %v515 = vpack.c.b16 %v435, %v427
    %v516 = vpack.c.b16 %v436, %v428
    %v517 = vpack.c.b16 %v437, %v429
    %v518 = vpack.c.b16 %v438, %v430
    %v519 = vpack.c.b16 %v439, %v431
    %v520 = vpack.c.b16 %v440, %v432
    %v521 = vpack.c.b16 %v441, %v433
    %v522 = vpack.c.b16 %v442, %v434
    %vm595 = vcmask 244736
    %v597 = vsel %vm595, %v80, 0
    %vm599 = vcmask 1046528
    %v601 = vsel %vm599, %v515, 0
    %v604 = vsel %vm599, %v516, 0
    %v607 = vsel %vm599, %v517, 0
    %v610 = vsel %vm599, %v518, 0
    %v613 = vsel %vm599, %v519, 0
    %v616 = vsel %vm599, %v520, 0
    %v619 = vsel %vm599, %v521, 0
    %v622 = vsel %vm599, %v522, 0
    %624 = vmatprep.subr.bf16.mxu0 %v444
    %625 = vmatpush1.bf16.msra.mxu0 %v443
    %626 = vmatprep.subr.bf16.mxu0 %v452
    %627 = vmatpush1.bf16.msra.mxu0 %v451
    %628 = vmatprep.subr.bf16.mxu0 %v460
    %629 = vmatpush1.bf16.msra.mxu0 %v459
    %630 = vmatprep.subr.bf16.mxu0 %v468
    %631 = vmatpush1.bf16.msra.mxu0 %v467
    %632 = vmatprep.subr.bf16.mxu0 %v476
    %633 = vmatpush1.bf16.msra.mxu0 %v475
    %634 = vmatprep.subr.bf16.mxu0 %v484
    %635 = vmatpush1.bf16.msra.mxu0 %v483
    %636 = vmatprep.subr.bf16.mxu0 %v492
    %637 = vmatpush1.bf16.msra.mxu0 %v491
    %638 = vmatprep.subr.bf16.mxu0 %v500
    %639 = vmatpush1.bf16.msra.mxu0 %v499
    %640 = vmatprep.subr.bf16.mxu0 %v508
    %641 = vmatpush1.bf16.msra.mxu0 %v507
    %642 = vmatprep.subr.bf16.mxu0 %v604
    %643 = vmatpush1.bf16.msra.mxu0 %v601
    %644 = vmatprep.subr.bf16.mxu0 0
    %645 = vmatpush1.bf16.msra.mxu0 0
    %646 = vmatprep.subr.bf16.mxu0 0
    %647 = vmatpush1.bf16.msra.mxu0 0
    %648 = vmatprep.subr.bf16.mxu0 0
    %649 = vmatpush1.bf16.msra.mxu0 0
    %650 = vmatprep.subr.bf16.mxu0 0
    %651 = vmatpush1.bf16.msra.mxu0 0
    %652 = vmatprep.subr.bf16.mxu0 0
    %653 = vmatpush1.bf16.msra.mxu0 0
    %654 = vmatprep.subr.bf16.mxu0 0
    %655 = vmatpush1.bf16.msra.mxu0 0
    %656 = vmatprep.mubr.bf16.mxu0 %v597
    %657 = vmatmul.mubr.bf16.gmra.mrb[0].mxu0 %v79
    %v658 = vpop.f32.mrb[0].mxu0
    %v659 = vadd.f32 %v166, %v658
    %v660 = vpop.f32.mrb[0].mxu0
    %v661 = vadd.f32 %v170, %v660
    %v662 = vpop.f32.mrb[0].mxu0
    %v663 = vadd.f32 %v166, %v662
    %v664 = vpop.f32.mrb[0].mxu0
    %v665 = vadd.f32 %v170, %v664
    %666 = vdwg.mxu0
    %667 = vmatprep.subr.bf16.mxu0 %v446
    %668 = vmatpush1.bf16.msra.mxu0 %v445
    %669 = vmatprep.subr.bf16.mxu0 %v454
    %670 = vmatpush1.bf16.msra.mxu0 %v453
    %671 = vmatprep.subr.bf16.mxu0 %v462
    %672 = vmatpush1.bf16.msra.mxu0 %v461
    %673 = vmatprep.subr.bf16.mxu0 %v470
    %674 = vmatpush1.bf16.msra.mxu0 %v469
    %675 = vmatprep.subr.bf16.mxu0 %v478
    %676 = vmatpush1.bf16.msra.mxu0 %v477
    %677 = vmatprep.subr.bf16.mxu0 %v486
    %678 = vmatpush1.bf16.msra.mxu0 %v485
    %679 = vmatprep.subr.bf16.mxu0 %v494
    %680 = vmatpush1.bf16.msra.mxu0 %v493
    %681 = vmatprep.subr.bf16.mxu0 %v502
    %682 = vmatpush1.bf16.msra.mxu0 %v501
    %683 = vmatprep.subr.bf16.mxu0 %v510
    %684 = vmatpush1.bf16.msra.mxu0 %v509
    %685 = vmatprep.subr.bf16.mxu0 %v610
    %686 = vmatpush1.bf16.msra.mxu0 %v607
    %687 = vmatprep.subr.bf16.mxu0 0
    %688 = vmatpush1.bf16.msra.mxu0 0
    %689 = vmatprep.subr.bf16.mxu0 0
    %690 = vmatpush1.bf16.msra.mxu0 0
    %691 = vmatprep.subr.bf16.mxu0 0
    %692 = vmatpush1.bf16.msra.mxu0 0
    %693 = vmatprep.subr.bf16.mxu0 0
    %694 = vmatpush1.bf16.msra.mxu0 0
    %695 = vmatprep.subr.bf16.mxu0 0
    %696 = vmatpush1.bf16.msra.mxu0 0
    %697 = vmatprep.subr.bf16.mxu0 0
    %698 = vmatpush1.bf16.msra.mxu0 0
    %699 = vmatprep.mubr.bf16.mxu0 %v597
    %700 = vmatmul.mubr.bf16.gmra.mrb[0].mxu0 %v79
    %v701 = vpop.f32.mrb[0].mxu0
    %v702 = vadd.f32 %v174, %v701
    %v703 = vpop.f32.mrb[0].mxu0
    %v704 = vadd.f32 %v178, %v703
    %v705 = vpop.f32.mrb[0].mxu0
    %v706 = vadd.f32 %v174, %v705
    %v707 = vpop.f32.mrb[0].mxu0
    %v708 = vadd.f32 %v178, %v707
    %709 = vdwg.mxu0
    %710 = vmatprep.subr.bf16.mxu0 %v448
    %711 = vmatpush1.bf16.msra.mxu0 %v447
    %712 = vmatprep.subr.bf16.mxu0 %v456
    %713 = vmatpush1.bf16.msra.mxu0 %v455
    %714 = vmatprep.subr.bf16.mxu0 %v464
    %715 = vmatpush1.bf16.msra.mxu0 %v463
    %716 = vmatprep.subr.bf16.mxu0 %v472
    %717 = vmatpush1.bf16.msra.mxu0 %v471
    %718 = vmatprep.subr.bf16.mxu0 %v480
    %719 = vmatpush1.bf16.msra.mxu0 %v479
    %720 = vmatprep.subr.bf16.mxu0 %v488
    %721 = vmatpush1.bf16.msra.mxu0 %v487
    %722 = vmatprep.subr.bf16.mxu0 %v496
    %723 = vmatpush1.bf16.msra.mxu0 %v495
    %724 = vmatprep.subr.bf16.mxu0 %v504
    %725 = vmatpush1.bf16.msra.mxu0 %v503
    %726 = vmatprep.subr.bf16.mxu0 %v512
    %727 = vmatpush1.bf16.msra.mxu0 %v511
    %728 = vmatprep.subr.bf16.mxu0 %v616
    %729 = vmatpush1.bf16.msra.mxu0 %v613
    %730 = vmatprep.subr.bf16.mxu0 0
    %731 = vmatpush1.bf16.msra.mxu0 0
    %732 = vmatprep.subr.bf16.mxu0 0
    %733 = vmatpush1.bf16.msra.mxu0 0
    %734 = vmatprep.subr.bf16.mxu0 0
    %735 = vmatpush1.bf16.msra.mxu0 0
    %736 = vmatprep.subr.bf16.mxu0 0
    %737 = vmatpush1.bf16.msra.mxu0 0
    %738 = vmatprep.subr.bf16.mxu0 0
    %739 = vmatpush1.bf16.msra.mxu0 0
    %740 = vmatprep.subr.bf16.mxu0 0
    %741 = vmatpush1.bf16.msra.mxu0 0
    %742 = vmatprep.mubr.bf16.mxu0 %v597
    %743 = vmatmul.mubr.bf16.gmra.mrb[0].mxu0 %v79
    %v744 = vpop.f32.mrb[0].mxu0
    %v745 = vadd.f32 %v182, %v744
    %v746 = vpop.f32.mrb[0].mxu0
    %v747 = vadd.f32 %v186, %v746
    %v748 = vpop.f32.mrb[0].mxu0
    %v749 = vadd.f32 %v182, %v748
    %v750 = vpop.f32.mrb[0].mxu0
    %v751 = vadd.f32 %v186, %v750
    %752 = vdwg.mxu0
    %753 = vmatprep.subr.bf16.mxu0 %v450
    %754 = vmatpush1.bf16.msra.mxu0 %v449
    %755 = vmatprep.subr.bf16.mxu0 %v458
    %756 = vmatpush1.bf16.msra.mxu0 %v457
    %757 = vmatprep.subr.bf16.mxu0 %v466
    %758 = vmatpush1.bf16.msra.mxu0 %v465
    %759 = vmatprep.subr.bf16.mxu0 %v474
    %760 = vmatpush1.bf16.msra.mxu0 %v473
    %761 = vmatprep.subr.bf16.mxu0 %v482
    %762 = vmatpush1.bf16.msra.mxu0 %v481
    %763 = vmatprep.subr.bf16.mxu0 %v490
    %764 = vmatpush1.bf16.msra.mxu0 %v489
    %765 = vmatprep.subr.bf16.mxu0 %v498
    %766 = vmatpush1.bf16.msra.mxu0 %v497
    %767 = vmatprep.subr.bf16.mxu0 %v506
    %768 = vmatpush1.bf16.msra.mxu0 %v505
    %769 = vmatprep.subr.bf16.mxu0 %v514
    %770 = vmatpush1.bf16.msra.mxu0 %v513
    %771 = vmatprep.subr.bf16.mxu0 %v622
    %772 = vmatpush1.bf16.msra.mxu0 %v619
    %773 = vmatprep.subr.bf16.mxu0 0
    %774 = vmatpush1.bf16.msra.mxu0 0
    %775 = vmatprep.subr.bf16.mxu0 0
    %776 = vmatpush1.bf16.msra.mxu0 0
    %777 = vmatprep.subr.bf16.mxu0 0
    %778 = vmatpush1.bf16.msra.mxu0 0
    %779 = vmatprep.subr.bf16.mxu0 0
    %780 = vmatpush1.bf16.msra.mxu0 0
    %781 = vmatprep.subr.bf16.mxu0 0
    %782 = vmatpush1.bf16.msra.mxu0 0
    %783 = vmatprep.subr.bf16.mxu0 0
    %784 = vmatpush1.bf16.msra.mxu0 0
    %785 = vmatprep.mubr.bf16.mxu0 %v597
    %786 = vmatmul.mubr.bf16.gmra.mrb[0].mxu0 %v79
    %v787 = vpop.f32.mrb[0].mxu0
    %v788 = vadd.f32 %v190, %v787
    %v789 = vpop.f32.mrb[0].mxu0
    %v790 = vadd.f32 %v194, %v789
    %v791 = vpop.f32.mrb[0].mxu0
    %v792 = vadd.f32 %v190, %v791
    %v793 = vpop.f32.mrb[0].mxu0
    %v794 = vadd.f32 %v194, %v793
    %795 = vdwg.mxu0
    %v796 = vmax.f32 %v659, 0.0
    %v797 = vmax.f32 %v661, 0.0
    %v798 = vmax.f32 %v702, 0.0
    %v799 = vmax.f32 %v704, 0.0
    %v800 = vmax.f32 %v745, 0.0
    %v801 = vmax.f32 %v747, 0.0
    %v802 = vmax.f32 %v788, 0.0
    %v803 = vmax.f32 %v790, 0.0
    %v804 = vmax.f32 %v663, 0.0
    %v805 = vmax.f32 %v665, 0.0
    %v806 = vmax.f32 %v706, 0.0
    %v807 = vmax.f32 %v708, 0.0
    %v808 = vmax.f32 %v749, 0.0
    %v809 = vmax.f32 %v751, 0.0
    %v810 = vmax.f32 %v792, 0.0
    %v811 = vmax.f32 %v794, 0.0
    %v812 = vpack.c.bf16 %v804, %v796
    %v813 = vpack.c.bf16 %v805, %v797
    %v814 = vpack.c.bf16 %v806, %v798
    %v815 = vpack.c.bf16 %v807, %v799
    %v816 = vpack.c.bf16 %v808, %v800
    %v817 = vpack.c.bf16 %v809, %v801
    %v818 = vpack.c.bf16 %v810, %v802
    %v819 = vpack.c.bf16 %v811, %v803
    %v820 = vld [vmem:[#allocation8] sm:$0xf]
    %v821 = vld [vmem:[#allocation8 + $0x4] sm:$0xf]
    %v822 = vld [vmem:[#allocation8 + $0x8] sm:$0xf]
    %v823 = vld [vmem:[#allocation8 + $0xc] sm:$0xf]
    %v824 = vld [vmem:[#allocation8 + $0x10] sm:$0xf]
    %v825 = vld [vmem:[#allocation8 + $0x14] sm:$0xf]
    %v826 = vld [vmem:[#allocation8 + $0x18] sm:$0xf]
    %v827 = vld [vmem:[#allocation8 + $0x1c] sm:$0xf]
    %v828 = vld [vmem:[#allocation8 + $0x20] sm:$0xf]
    %v829 = vld [vmem:[#allocation8 + $0x24] sm:$0xf]
    %v830 = vld [vmem:[#allocation8 + $0x28] sm:$0xf]
    %v831 = vld [vmem:[#allocation8 + $0x2c] sm:$0xf]
    %v832 = vld [vmem:[#allocation8 + $0x30] sm:$0xf]
    %v833 = vld [vmem:[#allocation8 + $0x34] sm:$0xf]
    %v834 = vld [vmem:[#allocation8 + $0x38] sm:$0xf]
    %v835 = vld [vmem:[#allocation8 + $0x3c] sm:$0xf]
    %v836 = vld [vmem:[#allocation8 + $0x40] sm:$0xf]
    %v837 = vld [vmem:[#allocation8 + $0x44] sm:$0xf]
    %v838 = vld [vmem:[#allocation8 + $0x48] sm:$0xf]
    %v839 = vld [vmem:[#allocation8 + $0x4c] sm:$0xf]
    %v840 = vld [vmem:[#allocation8 + $0x50] sm:$0xf]
    %v841 = vld [vmem:[#allocation8 + $0x54] sm:$0xf]
    %v842 = vld [vmem:[#allocation8 + $0x58] sm:$0xf]
    %v843 = vld [vmem:[#allocation8 + $0x5c] sm:$0xf]
    %v844 = vld [vmem:[#allocation8 + $0x60] sm:$0xf]
    %v845 = vld [vmem:[#allocation8 + $0x64] sm:$0xf]
    %v846 = vld [vmem:[#allocation8 + $0x68] sm:$0xf]
    %v847 = vld [vmem:[#allocation8 + $0x6c] sm:$0xf]
    %v848 = vld [vmem:[#allocation8 + $0x70] sm:$0xf]
    %v849 = vld [vmem:[#allocation8 + $0x74] sm:$0xf]
    %v850 = vld [vmem:[#allocation8 + $0x78] sm:$0xf]
    %v851 = vld [vmem:[#allocation8 + $0x7c] sm:$0xf]
    %v852 = vld [vmem:[#allocation8 + $0x80] sm:$0xf]
    %v853 = vld [vmem:[#allocation8 + $0x84] sm:$0xf]
    %v854 = vld [vmem:[#allocation8 + $0x88] sm:$0xf]
    %v855 = vld [vmem:[#allocation8 + $0x8c] sm:$0xf]
    %v856 = vld [vmem:[#allocation8 + $0x90] sm:$0xf]
    %v857 = vld [vmem:[#allocation8 + $0x94] sm:$0xf]
    %v858 = vld [vmem:[#allocation8 + $0x98] sm:$0xf]
    %v859 = vld [vmem:[#allocation8 + $0x9c] sm:$0xf]
    %v860 = vld [vmem:[#allocation8 + $0xa0] sm:$0xf]
    %v861 = vld [vmem:[#allocation8 + $0xa4] sm:$0xf]
    %v862 = vld [vmem:[#allocation8 + $0xa8] sm:$0xf]
    %v863 = vld [vmem:[#allocation8 + $0xac] sm:$0xf]
    %v864 = vld [vmem:[#allocation8 + $0xb0] sm:$0xf]
    %v865 = vld [vmem:[#allocation8 + $0xb4] sm:$0xf]
    %v866 = vld [vmem:[#allocation8 + $0xb8] sm:$0xf]
    %v867 = vld [vmem:[#allocation8 + $0xbc] sm:$0xf]
    %v868 = vld [vmem:[#allocation8 + $0xc0] sm:$0xf]
    %v869 = vld [vmem:[#allocation8 + $0xc4] sm:$0xf]
    %v870 = vld [vmem:[#allocation8 + $0xc8] sm:$0xf]
    %v871 = vld [vmem:[#allocation8 + $0xcc] sm:$0xf]
    %v872 = vld [vmem:[#allocation8 + $0xd0] sm:$0xf]
    %v873 = vld [vmem:[#allocation8 + $0xd4] sm:$0xf]
    %v874 = vld [vmem:[#allocation8 + $0xd8] sm:$0xf]
    %v875 = vld [vmem:[#allocation8 + $0xdc] sm:$0xf]
    %v876 = vld [vmem:[#allocation8 + $0xe0] sm:$0xf]
    %v877 = vld [vmem:[#allocation8 + $0xe4] sm:$0xf]
    %v878 = vld [vmem:[#allocation8 + $0xe8] sm:$0xf]
    %v879 = vld [vmem:[#allocation8 + $0xec] sm:$0xf]
    %v880 = vld [vmem:[#allocation8 + $0xf0] sm:$0xf]
    %v881 = vld [vmem:[#allocation8 + $0xf4] sm:$0xf]
    %v882 = vld [vmem:[#allocation8 + $0xf8] sm:$0xf]
    %v883 = vld [vmem:[#allocation8 + $0xfc] sm:$0xf]
    %v884 = vld [vmem:[#allocation8 + $0x100] sm:$0xf]
    %v885 = vld [vmem:[#allocation8 + $0x104] sm:$0xf]
    %v886 = vld [vmem:[#allocation8 + $0x108] sm:$0xf]
    %v887 = vld [vmem:[#allocation8 + $0x10c] sm:$0xf]
    %v888 = vld [vmem:[#allocation8 + $0x110] sm:$0xf]
    %v889 = vld [vmem:[#allocation8 + $0x114] sm:$0xf]
    %v890 = vld [vmem:[#allocation8 + $0x118] sm:$0xf]
    %v891 = vld [vmem:[#allocation8 + $0x11c] sm:$0xf]
    %v892 = vld [vmem:[#allocation8 + $0x120] sm:$0xf]
    %v893 = vld [vmem:[#allocation8 + $0x124] sm:$0xf]
    %v894 = vld [vmem:[#allocation8 + $0x128] sm:$0xf]
    %v895 = vld [vmem:[#allocation8 + $0x12c] sm:$0xf]
    %v896 = vld [vmem:[#allocation8 + $0x130] sm:$0xf]
    %v897 = vld [vmem:[#allocation8 + $0x134] sm:$0xf]
    %v898 = vld [vmem:[#allocation8 + $0x138] sm:$0xf]
    %v899 = vld [vmem:[#allocation8 + $0x13c] sm:$0xf]
    %v900 = vld [vmem:[#allocation8 + $0x140] sm:$0xf]
    %v901 = vld [vmem:[#allocation8 + $0x144] sm:$0xf]
    %v902 = vld [vmem:[#allocation8 + $0x148] sm:$0xf]
    %v903 = vld [vmem:[#allocation8 + $0x14c] sm:$0xf]
    %v904 = vld [vmem:[#allocation8 + $0x150] sm:$0xf]
    %v905 = vld [vmem:[#allocation8 + $0x154] sm:$0xf]
    %v906 = vld [vmem:[#allocation8 + $0x158] sm:$0xf]
    %v907 = vld [vmem:[#allocation8 + $0x15c] sm:$0xf]
    %v908 = vld [vmem:[#allocation8 + $0x160] sm:$0xf]
    %v909 = vld [vmem:[#allocation8 + $0x164] sm:$0xf]
    %v910 = vld [vmem:[#allocation8 + $0x168] sm:$0xf]
    %v911 = vld [vmem:[#allocation8 + $0x16c] sm:$0xf]
    %v912 = vld [vmem:[#allocation8 + $0x170] sm:$0xf]
    %v913 = vld [vmem:[#allocation8 + $0x174] sm:$0xf]
    %v914 = vld [vmem:[#allocation8 + $0x178] sm:$0xf]
    %v915 = vld [vmem:[#allocation8 + $0x17c] sm:$0xf]
    %v916 = vld [vmem:[#allocation8 + $0x180] sm:$0xf]
    %v917 = vld [vmem:[#allocation8 + $0x184] sm:$0xf]
    %v918 = vld [vmem:[#allocation8 + $0x188] sm:$0xf]
    %v919 = vld [vmem:[#allocation8 + $0x18c] sm:$0xf]
    %v920 = vld [vmem:[#allocation8 + $0x190] sm:$0xf]
    %v921 = vld [vmem:[#allocation8 + $0x194] sm:$0xf]
    %v922 = vld [vmem:[#allocation8 + $0x198] sm:$0xf]
    %v923 = vld [vmem:[#allocation8 + $0x19c] sm:$0xf]
    %v924 = vld [vmem:[#allocation8 + $0x1a0] sm:$0xf]
    %v925 = vld [vmem:[#allocation8 + $0x1a4] sm:$0xf]
    %v926 = vld [vmem:[#allocation8 + $0x1a8] sm:$0xf]
    %v927 = vld [vmem:[#allocation8 + $0x1ac] sm:$0xf]
    %v928 = vld [vmem:[#allocation8 + $0x1b0] sm:$0xf]
    %v929 = vld [vmem:[#allocation8 + $0x1b4] sm:$0xf]
    %v930 = vld [vmem:[#allocation8 + $0x1b8] sm:$0xf]
    %v931 = vld [vmem:[#allocation8 + $0x1bc] sm:$0xf]
    %v932 = vld [vmem:[#allocation8 + $0x1c0] sm:$0xf]
    %v933 = vld [vmem:[#allocation8 + $0x1c4] sm:$0xf]
    %v934 = vld [vmem:[#allocation8 + $0x1c8] sm:$0xf]
    %v935 = vld [vmem:[#allocation8 + $0x1cc] sm:$0xf]
    %v936 = vld [vmem:[#allocation8 + $0x1d0] sm:$0xf]
    %v937 = vld [vmem:[#allocation8 + $0x1d4] sm:$0xf]
    %v938 = vld [vmem:[#allocation8 + $0x1d8] sm:$0xf]
    %v939 = vld [vmem:[#allocation8 + $0x1dc] sm:$0xf]
    %v940 = vld [vmem:[#allocation8 + $0x1e0] sm:$0xf]
    %v941 = vld [vmem:[#allocation8 + $0x1e4] sm:$0xf]
    %v942 = vld [vmem:[#allocation8 + $0x1e8] sm:$0xf]
    %v943 = vld [vmem:[#allocation8 + $0x1ec] sm:$0xf]
    %v944 = vld [vmem:[#allocation8 + $0x1f0] sm:$0xf]
    %v945 = vld [vmem:[#allocation8 + $0x1f4] sm:$0xf]
    %v946 = vld [vmem:[#allocation8 + $0x1f8] sm:$0xf]
    %v947 = vld [vmem:[#allocation8 + $0x1fc] sm:$0xf]
    %v948 = vld [vmem:[%s4] sm:$0x1]
    %v950 = vlaneseq
    %v951 = vshrl.u32 %v950, 7
    %v952 = vsub.s32 0, %v951
    %v953 = vrot.slane %v948, %v952
    %v1083 = vunpack.c.l.b16 %v820
    %v1084 = vunpack.c.l.b16 %v821
    %v1085 = vunpack.c.l.b16 %v822
    %v1086 = vunpack.c.l.b16 %v823
    %v1087 = vunpack.c.l.b16 %v824
    %v1088 = vunpack.c.l.b16 %v825
    %v1089 = vunpack.c.l.b16 %v826
    %v1090 = vunpack.c.l.b16 %v827
    %v1091 = vunpack.c.l.b16 %v828
    %v1092 = vunpack.c.l.b16 %v829
    %v1093 = vunpack.c.l.b16 %v830
    %v1094 = vunpack.c.l.b16 %v831
    %v1095 = vunpack.c.l.b16 %v832
    %v1096 = vunpack.c.l.b16 %v833
    %v1097 = vunpack.c.l.b16 %v834
    %v1098 = vunpack.c.l.b16 %v835
    %v1099 = vunpack.c.l.b16 %v836
    %v1100 = vunpack.c.l.b16 %v837
    %v1101 = vunpack.c.l.b16 %v838
    %v1102 = vunpack.c.l.b16 %v839
    %v1103 = vunpack.c.l.b16 %v840
    %v1104 = vunpack.c.l.b16 %v841
    %v1105 = vunpack.c.l.b16 %v842
    %v1106 = vunpack.c.l.b16 %v843
    %v1107 = vunpack.c.l.b16 %v844
    %v1108 = vunpack.c.l.b16 %v845
    %v1109 = vunpack.c.l.b16 %v846
    %v1110 = vunpack.c.l.b16 %v847
    %v1111 = vunpack.c.l.b16 %v848
    %v1112 = vunpack.c.l.b16 %v849
    %v1113 = vunpack.c.l.b16 %v850
    %v1114 = vunpack.c.l.b16 %v851
    %v1115 = vunpack.c.l.b16 %v852
    %v1116 = vunpack.c.l.b16 %v853
    %v1117 = vunpack.c.l.b16 %v854
    %v1118 = vunpack.c.l.b16 %v855
    %v1119 = vunpack.c.l.b16 %v856
    %v1120 = vunpack.c.l.b16 %v857
    %v1121 = vunpack.c.l.b16 %v858
    %v1122 = vunpack.c.l.b16 %v859
    %v1123 = vunpack.c.l.b16 %v860
    %v1124 = vunpack.c.l.b16 %v861
    %v1125 = vunpack.c.l.b16 %v862
    %v1126 = vunpack.c.l.b16 %v863
    %v1127 = vunpack.c.l.b16 %v864
    %v1128 = vunpack.c.l.b16 %v865
    %v1129 = vunpack.c.l.b16 %v866
    %v1130 = vunpack.c.l.b16 %v867
    %v1131 = vunpack.c.l.b16 %v868
    %v1132 = vunpack.c.l.b16 %v869
    %v1133 = vunpack.c.l.b16 %v870
    %v1134 = vunpack.c.l.b16 %v871
    %v1135 = vunpack.c.l.b16 %v872
    %v1136 = vunpack.c.l.b16 %v873
    %v1137 = vunpack.c.l.b16 %v874
    %v1138 = vunpack.c.l.b16 %v875
    %v1139 = vunpack.c.l.b16 %v876
    %v1140 = vunpack.c.l.b16 %v877
    %v1141 = vunpack.c.l.b16 %v878
    %v1142 = vunpack.c.l.b16 %v879
    %v1143 = vunpack.c.l.b16 %v880
    %v1144 = vunpack.c.l.b16 %v881
    %v1145 = vunpack.c.l.b16 %v882
    %v1146 = vunpack.c.l.b16 %v883
    %v1147 = vunpack.c.l.b16 %v884
    %v1148 = vunpack.c.l.b16 %v885
    %v1149 = vunpack.c.l.b16 %v886
    %v1150 = vunpack.c.l.b16 %v887
    %v1151 = vunpack.c.l.b16 %v888
    %v1152 = vunpack.c.l.b16 %v889
    %v1153 = vunpack.c.l.b16 %v890
    %v1154 = vunpack.c.l.b16 %v891
    %v1155 = vunpack.c.l.b16 %v892
    %v1156 = vunpack.c.l.b16 %v893
    %v1157 = vunpack.c.l.b16 %v894
    %v1158 = vunpack.c.l.b16 %v895
    %v1159 = vunpack.c.l.b16 %v896
    %v1160 = vunpack.c.l.b16 %v897
    %v1161 = vunpack.c.l.b16 %v898
    %v1162 = vunpack.c.l.b16 %v899
    %v1163 = vunpack.c.l.b16 %v900
    %v1164 = vunpack.c.l.b16 %v901
    %v1165 = vunpack.c.l.b16 %v902
    %v1166 = vunpack.c.l.b16 %v903
    %v1167 = vunpack.c.l.b16 %v904
    %v1168 = vunpack.c.l.b16 %v905
    %v1169 = vunpack.c.l.b16 %v906
    %v1170 = vunpack.c.l.b16 %v907
    %v1171 = vunpack.c.l.b16 %v908
    %v1172 = vunpack.c.l.b16 %v909
    %v1173 = vunpack.c.l.b16 %v910
    %v1174 = vunpack.c.l.b16 %v911
    %v1175 = vunpack.c.l.b16 %v912
    %v1176 = vunpack.c.l.b16 %v913
    %v1177 = vunpack.c.l.b16 %v914
    %v1178 = vunpack.c.l.b16 %v915
    %v1179 = vunpack.c.l.b16 %v916
    %v1180 = vunpack.c.l.b16 %v917
    %v1181 = vunpack.c.l.b16 %v918
    %v1182 = vunpack.c.l.b16 %v919
    %v1183 = vunpack.c.l.b16 %v920
    %v1184 = vunpack.c.l.b16 %v921
    %v1185 = vunpack.c.l.b16 %v922
    %v1186 = vunpack.c.l.b16 %v923
    %v1187 = vunpack.c.l.b16 %v924
    %v1188 = vunpack.c.l.b16 %v925
    %v1189 = vunpack.c.l.b16 %v926
    %v1190 = vunpack.c.l.b16 %v927
    %v1191 = vunpack.c.l.b16 %v928
    %v1192 = vunpack.c.l.b16 %v929
    %v1193 = vunpack.c.l.b16 %v930
    %v1194 = vunpack.c.l.b16 %v931
    %v1195 = vunpack.c.l.b16 %v932
    %v1196 = vunpack.c.l.b16 %v933
    %v1197 = vunpack.c.l.b16 %v934
    %v1198 = vunpack.c.l.b16 %v935
    %v1199 = vunpack.c.l.b16 %v936
    %v1200 = vunpack.c.l.b16 %v937
    %v1201 = vunpack.c.l.b16 %v938
    %v1202 = vunpack.c.l.b16 %v939
    %v1203 = vunpack.c.l.b16 %v940
    %v1204 = vunpack.c.l.b16 %v941
    %v1205 = vunpack.c.l.b16 %v942
    %v1206 = vunpack.c.l.b16 %v943
    %v1207 = vunpack.c.l.b16 %v944
    %v1208 = vunpack.c.l.b16 %v945
    %v1209 = vunpack.c.l.b16 %v946
    %v1210 = vunpack.c.l.b16 %v947
    %v1211 = vpack.c.b16 %v1084, %v1083
    %v1212 = vpack.c.b16 %v1086, %v1085
    %v1213 = vpack.c.b16 %v1088, %v1087
    %v1214 = vpack.c.b16 %v1090, %v1089
    %v1215 = vpack.c.b16 %v1092, %v1091
    %v1216 = vpack.c.b16 %v1094, %v1093
    %v1217 = vpack.c.b16 %v1096, %v1095
    %v1218 = vpack.c.b16 %v1098, %v1097
    %v1219 = vpack.c.b16 %v1100, %v1099
    %v1220 = vpack.c.b16 %v1102, %v1101
    %v1221 = vpack.c.b16 %v1104, %v1103
    %v1222 = vpack.c.b16 %v1106, %v1105
    %v1223 = vpack.c.b16 %v1108, %v1107
    %v1224 = vpack.c.b16 %v1110, %v1109
    %v1225 = vpack.c.b16 %v1112, %v1111
    %v1226 = vpack.c.b16 %v1114, %v1113
    %v1227 = vpack.c.b16 %v1116, %v1115
    %v1228 = vpack.c.b16 %v1118, %v1117
    %v1229 = vpack.c.b16 %v1120, %v1119
    %v1230 = vpack.c.b16 %v1122, %v1121
    %v1231 = vpack.c.b16 %v1124, %v1123
    %v1232 = vpack.c.b16 %v1126, %v1125
    %v1233 = vpack.c.b16 %v1128, %v1127
    %v1234 = vpack.c.b16 %v1130, %v1129
    %v1235 = vpack.c.b16 %v1132, %v1131
    %v1236 = vpack.c.b16 %v1134, %v1133
    %v1237 = vpack.c.b16 %v1136, %v1135
    %v1238 = vpack.c.b16 %v1138, %v1137
    %v1239 = vpack.c.b16 %v1140, %v1139
    %v1240 = vpack.c.b16 %v1142, %v1141
    %v1241 = vpack.c.b16 %v1144, %v1143
    %v1242 = vpack.c.b16 %v1146, %v1145
    %v1243 = vpack.c.b16 %v1148, %v1147
    %v1244 = vpack.c.b16 %v1150, %v1149
    %v1245 = vpack.c.b16 %v1152, %v1151
    %v1246 = vpack.c.b16 %v1154, %v1153
    %v1247 = vpack.c.b16 %v1156, %v1155
    %v1248 = vpack.c.b16 %v1158, %v1157
    %v1249 = vpack.c.b16 %v1160, %v1159
    %v1250 = vpack.c.b16 %v1162, %v1161
    %v1251 = vpack.c.b16 %v1164, %v1163
    %v1252 = vpack.c.b16 %v1166, %v1165
    %v1253 = vpack.c.b16 %v1168, %v1167
    %v1254 = vpack.c.b16 %v1170, %v1169
    %v1255 = vpack.c.b16 %v1172, %v1171
    %v1256 = vpack.c.b16 %v1174, %v1173
    %v1257 = vpack.c.b16 %v1176, %v1175
    %v1258 = vpack.c.b16 %v1178, %v1177
    %v1259 = vpack.c.b16 %v1180, %v1179
    %v1260 = vpack.c.b16 %v1182, %v1181
    %v1261 = vpack.c.b16 %v1184, %v1183
    %v1262 = vpack.c.b16 %v1186, %v1185
    %v1263 = vpack.c.b16 %v1188, %v1187
    %v1264 = vpack.c.b16 %v1190, %v1189
    %v1265 = vpack.c.b16 %v1192, %v1191
    %v1266 = vpack.c.b16 %v1194, %v1193
    %v1267 = vpack.c.b16 %v1196, %v1195
    %v1268 = vpack.c.b16 %v1198, %v1197
    %v1269 = vpack.c.b16 %v1200, %v1199
    %v1270 = vpack.c.b16 %v1202, %v1201
    %v1271 = vpack.c.b16 %v1204, %v1203
    %v1272 = vpack.c.b16 %v1206, %v1205
    %v1273 = vpack.c.b16 %v1208, %v1207
    %v1274 = vpack.c.b16 %v1210, %v1209
    %1339 = vmatprep.subr.bf16.mxu0 0
    %1340 = vmatpush1.bf16.msra.mxu0 %v1211
    %1341 = vmatprep.subr.bf16.mxu0 0
    %1342 = vmatpush1.bf16.msra.mxu0 %v1212
    %1343 = vmatprep.subr.bf16.mxu0 0
    %1344 = vmatpush1.bf16.msra.mxu0 %v1213
    %1345 = vmatprep.subr.bf16.mxu0 0
    %1346 = vmatpush1.bf16.msra.mxu0 %v1214
    %1347 = vmatprep.subr.bf16.mxu0 0
    %1348 = vmatpush1.bf16.msra.mxu0 %v1215
    %1349 = vmatprep.subr.bf16.mxu0 0
    %1350 = vmatpush1.bf16.msra.mxu0 %v1216
    %1351 = vmatprep.subr.bf16.mxu0 0
    %1352 = vmatpush1.bf16.msra.mxu0 %v1217
    %1353 = vmatprep.subr.bf16.mxu0 0
    %1354 = vmatpush1.bf16.msra.mxu0 %v1218
    %1355 = vmatprep.subr.bf16.mxu0 0
    %1356 = vmatpush1.bf16.msra.mxu0 %v1219
    %1357 = vmatprep.subr.bf16.mxu0 0
    %1358 = vmatpush1.bf16.msra.mxu0 %v1220
    %1359 = vmatprep.subr.bf16.mxu0 0
    %1360 = vmatpush1.bf16.msra.mxu0 %v1221
    %1361 = vmatprep.subr.bf16.mxu0 0
    %1362 = vmatpush1.bf16.msra.mxu0 %v1222
    %1363 = vmatprep.subr.bf16.mxu0 0
    %1364 = vmatpush1.bf16.msra.mxu0 %v1223
    %1365 = vmatprep.subr.bf16.mxu0 0
    %1366 = vmatpush1.bf16.msra.mxu0 %v1224
    %1367 = vmatprep.subr.bf16.mxu0 0
    %1368 = vmatpush1.bf16.msra.mxu0 %v1225
    %1369 = vmatprep.subr.bf16.mxu0 0
    %1370 = vmatpush1.bf16.msra.mxu0 %v1226
    %1371 = vmatprep.mubr.bf16.mxu0 %v813
    %1372 = vmatmul.mubr.bf16.gmra.mrb[0].mxu0 %v812
    %v1373 = vpop.f32.mrb[0].mxu0
    %v1374 = vadd.f32 %v953, %v1373
    %v1375 = vpop.f32.mrb[0].mxu0
    %v1376 = vpop.f32.mrb[0].mxu0
    %v1377 = vadd.f32 %v953, %v1376
    %v1378 = vpop.f32.mrb[0].mxu0
    %1379 = vdwg.mxu0
    %1380 = vmatprep.subr.bf16.mxu0 0
    %1381 = vmatpush1.bf16.msra.mxu0 %v1227
    %1382 = vmatprep.subr.bf16.mxu0 0
    %1383 = vmatpush1.bf16.msra.mxu0 %v1228
    %1384 = vmatprep.subr.bf16.mxu0 0
    %1385 = vmatpush1.bf16.msra.mxu0 %v1229
    %1386 = vmatprep.subr.bf16.mxu0 0
    %1387 = vmatpush1.bf16.msra.mxu0 %v1230
    %1388 = vmatprep.subr.bf16.mxu0 0
    %1389 = vmatpush1.bf16.msra.mxu0 %v1231
    %1390 = vmatprep.subr.bf16.mxu0 0
    %1391 = vmatpush1.bf16.msra.mxu0 %v1232
    %1392 = vmatprep.subr.bf16.mxu0 0
    %1393 = vmatpush1.bf16.msra.mxu0 %v1233
    %1394 = vmatprep.subr.bf16.mxu0 0
    %1395 = vmatpush1.bf16.msra.mxu0 %v1234
    %1396 = vmatprep.subr.bf16.mxu0 0
    %1397 = vmatpush1.bf16.msra.mxu0 %v1235
    %1398 = vmatprep.subr.bf16.mxu0 0
    %1399 = vmatpush1.bf16.msra.mxu0 %v1236
    %1400 = vmatprep.subr.bf16.mxu0 0
    %1401 = vmatpush1.bf16.msra.mxu0 %v1237
    %1402 = vmatprep.subr.bf16.mxu0 0
    %1403 = vmatpush1.bf16.msra.mxu0 %v1238
    %1404 = vmatprep.subr.bf16.mxu0 0
    %1405 = vmatpush1.bf16.msra.mxu0 %v1239
    %1406 = vmatprep.subr.bf16.mxu0 0
    %1407 = vmatpush1.bf16.msra.mxu0 %v1240
    %1408 = vmatprep.subr.bf16.mxu0 0
    %1409 = vmatpush1.bf16.msra.mxu0 %v1241
    %1410 = vmatprep.subr.bf16.mxu0 0
    %1411 = vmatpush1.bf16.msra.mxu0 %v1242
    %1412 = vmatprep.mubr.bf16.mxu0 %v815
    %1413 = vmatmul.mubr.bf16.gmra.mrb[0].mxu0 %v814
    %v1414 = vpop.f32.mrb[0].mxu0
    %v1415 = vadd.f32 %v1374, %v1414
    %v1416 = vpop.f32.mrb[0].mxu0
    %v1417 = vpop.f32.mrb[0].mxu0
    %v1418 = vadd.f32 %v1377, %v1417
    %v1419 = vpop.f32.mrb[0].mxu0
    %1420 = vdwg.mxu0
    %1421 = vmatprep.subr.bf16.mxu0 0
    %1422 = vmatpush1.bf16.msra.mxu0 %v1243
    %1423 = vmatprep.subr.bf16.mxu0 0
    %1424 = vmatpush1.bf16.msra.mxu0 %v1244
    %1425 = vmatprep.subr.bf16.mxu0 0
    %1426 = vmatpush1.bf16.msra.mxu0 %v1245
    %1427 = vmatprep.subr.bf16.mxu0 0
    %1428 = vmatpush1.bf16.msra.mxu0 %v1246
    %1429 = vmatprep.subr.bf16.mxu0 0
    %1430 = vmatpush1.bf16.msra.mxu0 %v1247
    %1431 = vmatprep.subr.bf16.mxu0 0
    %1432 = vmatpush1.bf16.msra.mxu0 %v1248
    %1433 = vmatprep.subr.bf16.mxu0 0
    %1434 = vmatpush1.bf16.msra.mxu0 %v1249
    %1435 = vmatprep.subr.bf16.mxu0 0
    %1436 = vmatpush1.bf16.msra.mxu0 %v1250
    %1437 = vmatprep.subr.bf16.mxu0 0
    %1438 = vmatpush1.bf16.msra.mxu0 %v1251
    %1439 = vmatprep.subr.bf16.mxu0 0
    %1440 = vmatpush1.bf16.msra.mxu0 %v1252
    %1441 = vmatprep.subr.bf16.mxu0 0
    %1442 = vmatpush1.bf16.msra.mxu0 %v1253
    %1443 = vmatprep.subr.bf16.mxu0 0
    %1444 = vmatpush1.bf16.msra.mxu0 %v1254
    %1445 = vmatprep.subr.bf16.mxu0 0
    %1446 = vmatpush1.bf16.msra.mxu0 %v1255
    %1447 = vmatprep.subr.bf16.mxu0 0
    %1448 = vmatpush1.bf16.msra.mxu0 %v1256
    %1449 = vmatprep.subr.bf16.mxu0 0
    %1450 = vmatpush1.bf16.msra.mxu0 %v1257
    %1451 = vmatprep.subr.bf16.mxu0 0
    %1452 = vmatpush1.bf16.msra.mxu0 %v1258
    %1453 = vmatprep.mubr.bf16.mxu0 %v817
    %1454 = vmatmul.mubr.bf16.gmra.mrb[0].mxu0 %v816
    %v1455 = vpop.f32.mrb[0].mxu0
    %v1456 = vadd.f32 %v1415, %v1455
    %v1457 = vpop.f32.mrb[0].mxu0
    %v1458 = vpop.f32.mrb[0].mxu0
    %v1459 = vadd.f32 %v1418, %v1458
    %v1460 = vpop.f32.mrb[0].mxu0
    %1461 = vdwg.mxu0
    %1462 = vmatprep.subr.bf16.mxu0 0
    %1463 = vmatpush1.bf16.msra.mxu0 %v1259
    %1464 = vmatprep.subr.bf16.mxu0 0
    %1465 = vmatpush1.bf16.msra.mxu0 %v1260
    %1466 = vmatprep.subr.bf16.mxu0 0
    %1467 = vmatpush1.bf16.msra.mxu0 %v1261
    %1468 = vmatprep.subr.bf16.mxu0 0
    %1469 = vmatpush1.bf16.msra.mxu0 %v1262
    %1470 = vmatprep.subr.bf16.mxu0 0
    %1471 = vmatpush1.bf16.msra.mxu0 %v1263
    %1472 = vmatprep.subr.bf16.mxu0 0
    %1473 = vmatpush1.bf16.msra.mxu0 %v1264
    %1474 = vmatprep.subr.bf16.mxu0 0
    %1475 = vmatpush1.bf16.msra.mxu0 %v1265
    %1476 = vmatprep.subr.bf16.mxu0 0
    %1477 = vmatpush1.bf16.msra.mxu0 %v1266
    %1478 = vmatprep.subr.bf16.mxu0 0
    %1479 = vmatpush1.bf16.msra.mxu0 %v1267
    %1480 = vmatprep.subr.bf16.mxu0 0
    %1481 = vmatpush1.bf16.msra.mxu0 %v1268
    %1482 = vmatprep.subr.bf16.mxu0 0
    %1483 = vmatpush1.bf16.msra.mxu0 %v1269
    %1484 = vmatprep.subr.bf16.mxu0 0
    %1485 = vmatpush1.bf16.msra.mxu0 %v1270
    %1486 = vmatprep.subr.bf16.mxu0 0
    %1487 = vmatpush1.bf16.msra.mxu0 %v1271
    %1488 = vmatprep.subr.bf16.mxu0 0
    %1489 = vmatpush1.bf16.msra.mxu0 %v1272
    %1490 = vmatprep.subr.bf16.mxu0 0
    %1491 = vmatpush1.bf16.msra.mxu0 %v1273
    %1492 = vmatprep.subr.bf16.mxu0 0
    %1493 = vmatpush1.bf16.msra.mxu0 %v1274
    %1494 = vmatprep.mubr.bf16.mxu0 %v819
    %1495 = vmatmul.mubr.bf16.gmra.mrb[0].mxu0 %v818
    %v1496 = vpop.f32.mrb[0].mxu0
    %v1497 = vadd.f32 %v1456, %v1496
    %v1498 = vpop.f32.mrb[0].mxu0
    %v1499 = vpop.f32.mrb[0].mxu0
    %v1500 = vadd.f32 %v1459, %v1499
    %v1501 = vpop.f32.mrb[0].mxu0
    %1502 = vdwg.mxu0
    %v1503 = vpack.c.bf16 %v1500, %v1497
    %v1505 = vunpack.c.l.b16 %v1503
    %v1506 = vunpack.c.h.b16 %v1503
    %v1507 = vpack.c.b16 %v1505, %v1505
    %v1508 = vpack.c.b16 %v1506, %v1506
    %1511 = vst [vmem:[#allocation10] sm:$0xf] %v1507
    %1512 = vst [vmem:[#allocation10 + $0x4] sm:$0xf] %v1508
    // Predicated region
    $region38: #{_fused_forward.1} parent=1 // pred_check
      _
    $region39: #{_fused_forward.1} parent=1 // pred_check_branch
      %1514 = sbr.rel (0) target = $region41
    $region40: #{_fused_forward.1} parent=1 // pred_region
      %s1516 = ssub.s32 128, 128
      %1517 = vsyncadd [#allocation4], %s1516
      %s1518 = sshll.u32 [#allocation10], 4
      %s1519 = int_to_ptr.vmem [resolvable:$true] %s1518
      %1524 = dma.vmem_to_hbm [thread:$0]  %s1519, 128, %s5, [#allocation4], 64, 64, 4
    $region41: #{_fused_forward.1} parent=1 // pred_fallthru
      _
    // Predicated region
    $region42: #{_fused_forward.1} parent=1 // pred_check
      _
    $region43: #{_fused_forward.1} parent=1 // pred_check_branch
      %1526 = sbr.rel (0) target = $region45
    $region44: #{_fused_forward.1} parent=1 // pred_region
      %1527 = dma.done [#allocation4], 128
    $region45: #{_fused_forward.1} parent=1 // pred_fallthru
      _
    %1528 = vsyncpa [#allocation3], 1
    %1529 = vsyncpa [#allocation6], 1
    %1530 = vsyncpa [#allocation9], 1
    %1531 = vsyncpa [#allocation4], 1

</llo_original>
